<compile_context>
chip_gen: v6e
topology: v6e:2x2x1
jax: 0.10.0
libtpu: 0.0.40
codegen_flags: <defaults>
</compile_context>

<pallas_src>
import functools

import jax
import jax.numpy as jnp
import numpy as np
from jax.experimental import pallas as pl
from jax.experimental.pallas import tpu as pltpu

N_CLASSES = 10
HIDDEN = 32
C_MID = 8
NH_PAD = 128          # lane-dense fused (classes | hidden) head width


def _round_up(x, m):
    return -(-x // m) * m


# -----------------------------------------------------------------------------
# Fused kernel.  grid = (num_batch_blocks,), each step handles b_tile images.
#   conv (3 banded matmuls) + bias + ReLU
#   -> single batched head matmul (width/channel pooling folded into the weights)
#   -> height reduction + 1/HW scale + head bias
#   -> lanes [0,NC) = class logits, lanes [NC,NC+HD) = tanh(hidden)
# -----------------------------------------------------------------------------
def _fused_encoder_kernel(b_tile, img_h, n_classes, hidden_dim, inv_hw,
                          x_ref, wband_ref, bband_ref, wheads_ref, bheads_ref,
                          out_ref):
    roww = x_ref.shape[2]            # (W+2)*C_in   (= 72 here, NOT padded to 128)
    nh = out_ref.shape[2]            # NH_PAD
    m = b_tile * img_h               # matmul M: batch folded in

    x = x_ref[...]                   # [b_tile, H+2, roww] bf16, VMEM resident

    # --- 3x3 / pad=1 conv as three row-banded matmuls (no im2col tensor) -------
    #   conv_rows[b*H + i, :] = sum_di  x[b, i+di, :] @ w_band[di]
    acc = jnp.dot(x[:, 0:img_h, :].reshape(m, roww), wband_ref[0],
                  preferred_element_type=jnp.float32)
    for di in (1, 2):
        acc += jnp.dot(x[:, di:di + img_h, :].reshape(m, roww), wband_ref[di],
                       preferred_element_type=jnp.float32)
    act = jnp.maximum(acc + bband_ref[...], 0.0)        # conv bias + ReLU, [m, W*C_mid]

    # --- global-average-pool + both heads in one batched matmul ----------------
    # Width/channel pooling is pre-folded into the row-replicated head weights, so
    # pooled @ W_heads == (1/HW) * sum_rows( act @ W_heads_expanded ).
    y = jnp.dot(act.astype(jnp.bfloat16), wheads_ref[...],
                preferred_element_type=jnp.float32)      # [m, NH_PAD]
    z = y.reshape(b_tile, img_h, nh).sum(axis=1) * inv_hw + bheads_ref[...]

    col = jax.lax.broadcasted_iota(jnp.int32, z.shape, 1)
    is_hid = (col >= n_classes) & (col < n_classes + hidden_dim)
    res = jnp.where(is_hid, jnp.tanh(z), z)              # logits | tanh(hidden) | 0-pad
    out_ref[...] = res.reshape(out_ref.shape)            # one full-block write per step


def fused_visual_encoder(xp_rows, w_band, b_band, w_heads, b_heads, *,
                         img_h, img_w, n_classes=N_CLASSES, hidden_dim=HIDDEN):
    B, hp2, roww = xp_rows.shape
    wc = w_band.shape[2]
    nh = w_heads.shape[1]

    # Two 'parallel' batch blocks when possible so v7x's 2 TensorCores both get work;
    # each block still folds b_tile images into the matmul M dimension.  On v5e/v6e the
    # extra grid step is ~0.35us of fixed overhead (noise at this size).
    n_blocks = 2 if (B % 2 == 0 and B >= 2) else 1
    b_tile = B // n_blocks
    inv_hw = 1.0 / float(img_h * img_w)

    kernel = functools.partial(_fused_encoder_kernel, b_tile, img_h,
                               n_classes, hidden_dim, inv_hw)

    flops = 6 * B * img_h * roww * wc + 2 * B * img_h * wc * nh
    bytes_accessed = (xp_rows.size * xp_rows.dtype.itemsize
                      + w_band.size * w_band.dtype.itemsize
                      + b_band.size * 4
                      + w_heads.size * w_heads.dtype.itemsize
                      + b_heads.size * 4
                      + B * nh * 4)
    cost = pl.CostEstimate(flops=flops, transcendentals=B * nh,
                           bytes_accessed=bytes_accessed)

    out = pl.pallas_call(
        kernel,
        out_shape=jax.ShapeDtypeStruct((n_blocks, b_tile, nh), jnp.float32),
        grid=(n_blocks,),
        in_specs=[
            pl.BlockSpec((b_tile, hp2, roww), lambda g: (g, 0, 0)),   # padded image rows
            pl.BlockSpec((3, roww, wc), lambda g: (0, 0, 0)),         # banded conv weight
            pl.BlockSpec((1, wc), lambda g: (0, 0)),                  # row-tiled conv bias
            pl.BlockSpec((wc, nh), lambda g: (0, 0)),                 # fused head weight
            pl.BlockSpec((1, nh), lambda g: (0, 0)),                  # fused head bias
        ],
        out_specs=pl.BlockSpec((1, b_tile, nh), lambda g: (g, 0, 0)),
        compiler_params=pltpu.CompilerParams(
            dimension_semantics=("parallel",),
            # ~200 KB actual usage; explicit budget kept safe for v7x's smaller VMEM.
            vmem_limit_bytes=32 * 1024 * 1024,
        ),
        cost_estimate=cost,
    )(xp_rows, w_band, b_band, w_heads, b_heads)

    return out.reshape(B, nh)


# -----------------------------------------------------------------------------
# Parameter repacking: plain f32 conv/linear weights -> kernel's lane-dense layouts.
# Padding columns/rows are exactly zero, so they never contaminate the heads.
# -----------------------------------------------------------------------------
def pack_params(w_conv, b_conv, w_cls, b_cls, w_hid, b_hid, *, img_w,
                n_classes=N_CLASSES, hidden_dim=HIDDEN):
    w_conv = np.asarray(w_conv, np.float32)     # [3, 3, C_in, C_mid] (HWIO)
    b_conv = np.asarray(b_conv, np.float32).reshape(-1)
    w_cls = np.asarray(w_cls, np.float32)       # [C_mid, n_classes]
    b_cls = np.asarray(b_cls, np.float32).reshape(-1)
    w_hid = np.asarray(w_hid, np.float32)       # [C_mid, hidden_dim]
    b_hid = np.asarray(b_hid, np.float32).reshape(-1)

    kh, kw, c_in, c_mid = w_conv.shape
    assert (kh, kw) == (3, 3)
    assert n_classes + hidden_dim <= NH_PAD
    roww = (img_w + 2) * c_in
    wc = _round_up(max(img_w * c_mid, 128), 128)    # lane-dense conv-row width (=128 here)

    # Row-banded conv weight:  conv_row[i] = sum_di  padded_row[i+di] @ w_band[di].
    w_band = np.zeros((3, roww, wc), np.float32)
    for di in range(3):
        for dj in range(3):
            for j in range(img_w):
                w_band[di, (j + dj) * c_in:(j + dj + 1) * c_in,
                       j * c_mid:(j + 1) * c_mid] = w_conv[di, dj]
    b_band = np.zeros((1, wc), np.float32)
    b_band[0, :img_w * c_mid] = np.tile(b_conv, img_w)

    # Width/channel pooling folded into the head weights: replicate per column j.
    w_heads = np.zeros((wc, NH_PAD), np.float32)
    b_heads = np.zeros((1, NH_PAD), np.float32)
    for j in range(img_w):
        w_heads[j * c_mid:(j + 1) * c_mid, :n_classes] = w_cls
        w_heads[j * c_mid:(j + 1) * c_mid, n_classes:n_classes + hidden_dim] = w_hid
    b_heads[0, :n_classes] = b_cls
    b_heads[0, n_classes:n_classes + hidden_dim] = b_hid

    return dict(
        w_band=jnp.asarray(w_band, jnp.bfloat16),    # bf16 MXU inputs, f32 accumulate
        b_band=jnp.asarray(b_band, jnp.float32),
        w_heads=jnp.asarray(w_heads, jnp.bfloat16),  # bf16 per review (halves residency)
        b_heads=jnp.asarray(b_heads, jnp.float32),
    )


# -----------------------------------------------------------------------------
# VisualEncoder.forward: (image_preds, hidden)
# -----------------------------------------------------------------------------
def visual_encoder_forward(x_nchw, packed, *, n_classes=N_CLASSES, hidden_dim=HIDDEN):
    B, c_in, H, W = x_nchw.shape
    # Single tiny producer pass over the RAW image (no 9x im2col expansion):
    # NCHW->NHWC transpose + zero pad (conv padding=1) + row-flatten + bf16 cast.
    # TODO(synk): fold this transpose/pad into the kernel's input DMA; kept outside
    # because the C_in=4 NCHW lane layout is too narrow to relayout robustly in-kernel.
    x = jnp.transpose(x_nchw, (0, 2, 3, 1)).astype(jnp.float32)
    xp = jnp.pad(x, ((0, 0), (1, 1), (1, 1), (0, 0)))
    xp_rows = xp.reshape(B, H + 2, (W + 2) * c_in).astype(jnp.bfloat16)

    out = fused_visual_encoder(
        xp_rows, packed["w_band"], packed["b_band"],
        packed["w_heads"], packed["b_heads"],
        img_h=H, img_w=W, n_classes=n_classes, hidden_dim=hidden_dim)

    image_preds = out[:, :n_classes]                        # cnn "output"
    hidden = out[:, n_classes:n_classes + hidden_dim]       # to_hidden(neural_code)
    return image_preds, hidden


# Pure-JAX f32 reference (PyTorch semantics) for a tolerance check.
def reference_forward(x_nchw, w_conv, b_conv, w_cls, b_cls, w_hid, b_hid):
    x = jnp.transpose(x_nchw, (0, 2, 3, 1)).astype(jnp.float32)
    feat = jax.lax.conv_general_dilated(
        x, jnp.asarray(w_conv, jnp.float32), window_strides=(1, 1), padding="SAME",
        dimension_numbers=("NHWC", "HWIO", "NHWC"))
    feat = jnp.maximum(feat + b_conv, 0.0)
    pooled = feat.mean(axis=(1, 2))                 # "neural_code"
    preds = pooled @ w_cls + b_cls                  # cnn "output"
    hidden = jnp.tanh(pooled @ w_hid + b_hid)       # to_hidden
    return preds, hidden


if __name__ == "__main__":
    key = jax.random.PRNGKey(0)
    kx, k1, k2, k3, k4 = jax.random.split(key, 5)

    B, C_IN, H, W = 2, 4, 16, 16
    x = jax.random.normal(kx, (B, C_IN, H, W), jnp.float32)    # NCHW like PyTorch

    # Plain f32 parameters (PyTorch-equivalent layouts), then kernel repack.
    w_conv = 0.1 * jax.random.normal(k1, (3, 3, C_IN, C_MID), jnp.float32)
    b_conv = jnp.full((C_MID,), 0.01, jnp.float32)
    w_cls = 0.1 * jax.random.normal(k2, (C_MID, N_CLASSES), jnp.float32)
    b_cls = jnp.zeros((N_CLASSES,), jnp.float32)
    w_hid = 0.1 * jax.random.normal(k3, (C_MID, HIDDEN), jnp.float32)
    b_hid = 0.05 * jax.random.normal(k4, (HIDDEN,), jnp.float32)

    packed = pack_params(w_conv, b_conv, w_cls, b_cls, w_hid, b_hid, img_w=W)

    image_preds, hidden = jax.jit(visual_encoder_forward)(x, packed)
    jax.block_until_ready((image_preds, hidden))

    assert image_preds.shape == (B, N_CLASSES)
    assert hidden.shape == (B, HIDDEN)

    # Loose tolerance covers the kernel's bf16 MXU inputs (f32 reference otherwise).
    ref_preds, ref_hidden = reference_forward(x, w_conv, b_conv, w_cls, b_cls, w_hid, b_hid)
    assert jnp.allclose(image_preds, ref_preds, atol=3e-2, rtol=3e-2)
    assert jnp.allclose(hidden, ref_hidden, atol=3e-2, rtol=3e-2)

    print("KERNEL_OK")
</pallas_src>

<mosaic_0001>
module attributes {stable_mosaic.version = 11 : i64} {
  func.func @_fused_encoder_kernel(%arg0: i32, %arg1: memref<1x18x72xbf16, #tpu.memory_space<vmem>>, %arg2: memref<3x72x128xbf16, #tpu.memory_space<vmem>>, %arg3: memref<1x128xf32, #tpu.memory_space<vmem>>, %arg4: memref<128x128xbf16, #tpu.memory_space<vmem>>, %arg5: memref<1x128xf32, #tpu.memory_space<vmem>>, %arg6: memref<1x1x128xf32, #tpu.memory_space<vmem>>) attributes {dimension_semantics = [#tpu.dimension_semantics<parallel>], iteration_bounds = array<i64: 2>, scalar_prefetch = 0 : i64, scratch_operands = 0 : i64, tpu.core_type = #tpu.core_type<tc>, window_params = [{transform_indices = @transform_0, window_bounds = array<i64: 1, 18, 72>}, {pipeline_mode = #tpu.pipeline_mode<synchronous>, transform_indices = @transform_1, window_bounds = array<i64: 3, 72, 128>}, {pipeline_mode = #tpu.pipeline_mode<synchronous>, transform_indices = @transform_2, window_bounds = array<i64: 1, 128>}, {pipeline_mode = #tpu.pipeline_mode<synchronous>, transform_indices = @transform_3, window_bounds = array<i64: 128, 128>}, {pipeline_mode = #tpu.pipeline_mode<synchronous>, transform_indices = @transform_4, window_bounds = array<i64: 1, 128>}, {transform_indices = @transform_5, window_bounds = array<i64: 1, 1, 128>}]} {
    %c0 = arith.constant 0 : index
    %c0_0 = arith.constant 0 : index
    %c0_1 = arith.constant 0 : index
    %0 = vector.load %arg1[%c0, %c0_0, %c0_1] : memref<1x18x72xbf16, #tpu.memory_space<vmem>>, vector<1x18x72xbf16>
    %1 = vector.extract_strided_slice %0 {offsets = [0, 0, 0], sizes = [1, 16, 72], strides = [1, 1, 1]} : vector<1x18x72xbf16> to vector<1x16x72xbf16>
    %2 = vector.shape_cast %1 : vector<1x16x72xbf16> to vector<16x72xbf16>
    %c0_2 = arith.constant 0 : index
    %c0_3 = arith.constant 0 : index
    %c0_4 = arith.constant 0 : index
    %3 = vector.load %arg2[%c0_2, %c0_3, %c0_4] : memref<3x72x128xbf16, #tpu.memory_space<vmem>>, vector<1x72x128xbf16>
    %4 = vector.shape_cast %3 : vector<1x72x128xbf16> to vector<72x128xbf16>
    %cst = arith.constant dense<0.000000e+00> : vector<16x128xf32>
    %5 = tpu.matmul %2, %4, %cst {dimension_numbers = #tpu.dot_dimension_numbers<[1], [0], [0], [1], [0, 0, 1, 1], [], []>} : vector<16x72xbf16>, vector<72x128xbf16>, vector<16x128xf32> -> vector<16x128xf32>
    %6 = vector.extract_strided_slice %0 {offsets = [0, 1, 0], sizes = [1, 16, 72], strides = [1, 1, 1]} : vector<1x18x72xbf16> to vector<1x16x72xbf16>
    %7 = vector.shape_cast %6 : vector<1x16x72xbf16> to vector<16x72xbf16>
    %c1 = arith.constant 1 : index
    %c0_5 = arith.constant 0 : index
    %c0_6 = arith.constant 0 : index
    %8 = vector.load %arg2[%c1, %c0_5, %c0_6] : memref<3x72x128xbf16, #tpu.memory_space<vmem>>, vector<1x72x128xbf16>
    %9 = vector.shape_cast %8 : vector<1x72x128xbf16> to vector<72x128xbf16>
    %cst_7 = arith.constant dense<0.000000e+00> : vector<16x128xf32>
    %10 = tpu.matmul %7, %9, %cst_7 {dimension_numbers = #tpu.dot_dimension_numbers<[1], [0], [0], [1], [0, 0, 1, 1], [], []>} : vector<16x72xbf16>, vector<72x128xbf16>, vector<16x128xf32> -> vector<16x128xf32>
    %11 = arith.addf %5, %10 : vector<16x128xf32>
    %12 = vector.extract_strided_slice %0 {offsets = [0, 2, 0], sizes = [1, 16, 72], strides = [1, 1, 1]} : vector<1x18x72xbf16> to vector<1x16x72xbf16>
    %13 = vector.shape_cast %12 : vector<1x16x72xbf16> to vector<16x72xbf16>
    %c2 = arith.constant 2 : index
    %c0_8 = arith.constant 0 : index
    %c0_9 = arith.constant 0 : index
    %14 = vector.load %arg2[%c2, %c0_8, %c0_9] : memref<3x72x128xbf16, #tpu.memory_space<vmem>>, vector<1x72x128xbf16>
    %15 = vector.shape_cast %14 : vector<1x72x128xbf16> to vector<72x128xbf16>
    %cst_10 = arith.constant dense<0.000000e+00> : vector<16x128xf32>
    %16 = tpu.matmul %13, %15, %cst_10 {dimension_numbers = #tpu.dot_dimension_numbers<[1], [0], [0], [1], [0, 0, 1, 1], [], []>} : vector<16x72xbf16>, vector<72x128xbf16>, vector<16x128xf32> -> vector<16x128xf32>
    %17 = arith.addf %11, %16 : vector<16x128xf32>
    %c0_11 = arith.constant 0 : index
    %c0_12 = arith.constant 0 : index
    %18 = vector.load %arg3[%c0_11, %c0_12] : memref<1x128xf32, #tpu.memory_space<vmem>>, vector<1x128xf32>
    %19 = vector.broadcast %18 : vector<1x128xf32> to vector<16x128xf32>
    %20 = arith.addf %17, %19 : vector<16x128xf32>
    %cst_13 = arith.constant 0.000000e+00 : f32
    %21 = vector.broadcast %cst_13 : f32 to vector<16x128xf32>
    %22 = arith.maximumf %20, %21 : vector<16x128xf32>
    %23 = arith.truncf %22 : vector<16x128xf32> to vector<16x128xbf16>
    %c0_14 = arith.constant 0 : index
    %c0_15 = arith.constant 0 : index
    %24 = vector.load %arg4[%c0_14, %c0_15] : memref<128x128xbf16, #tpu.memory_space<vmem>>, vector<128x128xbf16>
    %cst_16 = arith.constant dense<0.000000e+00> : vector<16x128xf32>
    %25 = tpu.matmul %23, %24, %cst_16 {dimension_numbers = #tpu.dot_dimension_numbers<[1], [0], [0], [1], [0, 0, 1, 1], [], []>} : vector<16x128xbf16>, vector<128x128xbf16>, vector<16x128xf32> -> vector<16x128xf32>
    %26 = vector.shape_cast %25 : vector<16x128xf32> to vector<1x16x128xf32>
    %cst_17 = arith.constant dense<0.000000e+00> : vector<1x128xf32>
    %27 = vector.multi_reduction <add>, %26, %cst_17 [1] : vector<1x16x128xf32> to vector<1x128xf32>
    %cst_18 = arith.constant 3.906250e-03 : f32
    %28 = vector.broadcast %cst_18 : f32 to vector<1x128xf32>
    %29 = arith.mulf %27, %28 : vector<1x128xf32>
    %c0_19 = arith.constant 0 : index
    %c0_20 = arith.constant 0 : index
    %30 = vector.load %arg5[%c0_19, %c0_20] : memref<1x128xf32, #tpu.memory_space<vmem>>, vector<1x128xf32>
    %31 = arith.addf %29, %30 : vector<1x128xf32>
    %32 = tpu.iota {dimensions = array<i32: 1>} : vector<1x128xi32>
    %c10_i32 = arith.constant 10 : i32
    %33 = vector.broadcast %c10_i32 : i32 to vector<1x128xi32>
    %34 = arith.cmpi sge, %32, %33 : vector<1x128xi32>
    %c42_i32 = arith.constant 42 : i32
    %35 = vector.broadcast %c42_i32 : i32 to vector<1x128xi32>
    %36 = arith.cmpi slt, %32, %35 : vector<1x128xi32>
    %37 = arith.andi %34, %36 : vector<1x128xi1>
    %38 = math.tanh %31 : vector<1x128xf32>
    %39 = arith.select %37, %38, %31 : vector<1x128xi1>, vector<1x128xf32>
    %40 = vector.shape_cast %39 : vector<1x128xf32> to vector<1x1x128xf32>
    %c0_21 = arith.constant 0 : index
    %c0_22 = arith.constant 0 : index
    %c0_23 = arith.constant 0 : index
    %41 = vector.load %arg6[%c0_21, %c0_22, %c0_23] : memref<1x1x128xf32, #tpu.memory_space<vmem>>, vector<1x1x128xf32>
    tpu.vector_store %arg6[%c0_21, %c0_22, %c0_23], %40 {strides = array<i32>} : memref<1x1x128xf32, #tpu.memory_space<vmem>>, vector<1x1x128xf32>,
    return
  }
  func.func @transform_0(%arg0: i32) -> (i32, i32, i32) {
    %c0_i32 = arith.constant 0 : i32
    %c0_i32_0 = arith.constant 0 : i32
    %c0_i32_1 = arith.constant 0 : i32
    return %arg0, %c0_i32, %c0_i32_0 : i32, i32, i32
  }
  func.func @transform_1(%arg0: i32) -> (i32, i32, i32) {
    %c0_i32 = arith.constant 0 : i32
    %c0_i32_0 = arith.constant 0 : i32
    %c0_i32_1 = arith.constant 0 : i32
    %c0_i32_2 = arith.constant 0 : i32
    return %c0_i32, %c0_i32_0, %c0_i32_1 : i32, i32, i32
  }
  func.func @transform_2(%arg0: i32) -> (i32, i32) {
    %c0_i32 = arith.constant 0 : i32
    %c0_i32_0 = arith.constant 0 : i32
    %c0_i32_1 = arith.constant 0 : i32
    return %c0_i32, %c0_i32_0 : i32, i32
  }
  func.func @transform_3(%arg0: i32) -> (i32, i32) {
    %c0_i32 = arith.constant 0 : i32
    %c0_i32_0 = arith.constant 0 : i32
    %c0_i32_1 = arith.constant 0 : i32
    return %c0_i32, %c0_i32_0 : i32, i32
  }
  func.func @transform_4(%arg0: i32) -> (i32, i32) {
    %c0_i32 = arith.constant 0 : i32
    %c0_i32_0 = arith.constant 0 : i32
    %c0_i32_1 = arith.constant 0 : i32
    return %c0_i32, %c0_i32_0 : i32, i32
  }
  func.func @transform_5(%arg0: i32) -> (i32, i32, i32) {
    %c0_i32 = arith.constant 0 : i32
    %c0_i32_0 = arith.constant 0 : i32
    %c0_i32_1 = arith.constant 0 : i32
    return %arg0, %c0_i32, %c0_i32_0 : i32, i32, i32
  }
}

</mosaic_0001>

<llo_original>
// kernel: visual_encoder_forward.1
$region0: #{visual_encoder_forward.1}
  #allocation0 [shape = 'u32[]', space=smem, size = 0x4, offset = 0x4, fixed_abs, tag = 'smem constant byte address 0x4 - core index']
  #allocation1 [shape = 'u32[144,128]{1,0:T(1,128)}', space=vmem, size = 0x12000, scoped, tag = 'internal scratch']
  %s0 = inlined_call_operand.vmem [shape: bf16[2,18,72], index: 0, kind: input, shape index: {}]
  %s1 = inlined_call_operand.vmem [shape: bf16[3,72,128], index: 1, kind: input, shape index: {}]
  %s2 = inlined_call_operand.vmem [shape: f32[1,128], index: 2, kind: input, shape index: {}]
  %s3 = inlined_call_operand.vmem [shape: bf16[128,128], index: 3, kind: input, shape index: {}]
  %s4 = inlined_call_operand.vmem [shape: f32[1,128], index: 4, kind: input, shape index: {}]
  %s5 = inlined_call_operand.vmem [shape: f32[2,1,128], index: 5, kind: output, shape index: {}]
  %s6 = sld [smem:[#allocation0]]
  $region53: #{visual_encoder_forward.1} parent=0
    _
  %s8 = ssub.s32 1, %s6
  %s9 = scalar_select 0, %s8, %s6
  loop: start=0, step=1, limit=4
  $region2: #{visual_encoder_forward.1} parent=0 // loop_pre_header
    _
  $region3: #{visual_encoder_forward.1} parent=0 // loop_header
    %s11 = sphi 0, %s15
    %p12 = scmp.ge.s32.totalorder %s11, 4
    %s21 = sphi 0, %s23
    %s24 = sphi 0, %s21
    %s25 = sphi 0, %s24
    %s41 = sphi 0, %s25
    %s45 = sphi 0, %s45
    %s47 = sphi 0, %s45
    %s48 = sphi 0, %s47
    %s62 = sphi 0, %s48
    %s66 = sphi 0, %s66
    %s68 = sphi 0, %s66
    %s69 = sphi 0, %s68
    %s83 = sphi 0, %s69
    %s87 = sphi 0, %s87
    %s89 = sphi 0, %s87
    %s90 = sphi 0, %s89
    %s104 = sphi 0, %s90
    %s108 = sphi 0, %s108
    %s110 = sphi 0, %s108
    %s111 = sphi 0, %s110
    %s125 = sphi 0, %s111
    %s131 = sphi 0, %s133
    %s134 = sphi 0, %s131
    %s135 = sphi 0, %s134
    %s151 = sphi 0, %s135
  $region4: #{visual_encoder_forward.1} parent=0 // loop_header_branch
    %14 = sbr.rel (%p12) target = $region8
  $region5: #{visual_encoder_forward.1} parent=0 // loop_body
    %s16 = ssub.s32 %s11, 1
    %s17 = ssub.s32 %s11, 2
    %s18 = sadd.s32 %s11, 1
    %s19 = ssub.s32 %s11, %s18
    %p20 = scmp.eq.s32.totalorder %s19, 0
    %s22 = sadd.s32 %s21, 1
    %s23 = scalar_select %p20, %s21, %s22
    %p26 = pneg %p20
    %p27 = scmp.eq.s32.totalorder %s11, 1
    %p28 = por %p26, %p27
    %p29 = scmp.ne.s32.totalorder %s21, %s24
    %p30 = scmp.eq.s32.totalorder %s11, 0
    %p31 = por %p29, %p30
    %p32 = scmp.ne.s32.totalorder %s21, %s24
    %p33 = scmp.eq.s32.totalorder %s16, 1
    %p34 = por %p32, %p33
    %p35 = scmp.ne.s32.totalorder %s24, %s25
    %p36 = scmp.eq.s32.totalorder %s16, 0
    %p37 = por %p35, %p36
    %p38 = scmp.ne.s32.totalorder %s24, %s25
    %p39 = scmp.eq.s32.totalorder %s17, 1
    %p40 = por %p38, %p39
    %p42 = scmp.ne.s32.totalorder %s25, %s41
    %p43 = scmp.eq.s32.totalorder %s17, 0
    %p44 = por %p42, %p43
    %s46 = sadd.s32 %s45, 1
    %p49 = scmp.eq.s32.totalorder %s11, 1
    %p50 = scmp.ne.s32.totalorder %s45, %s47
    %p51 = scmp.eq.s32.totalorder %s11, 0
    %p52 = por %p50, %p51
    %p53 = scmp.ne.s32.totalorder %s45, %s47
    %p54 = scmp.eq.s32.totalorder %s16, 1
    %p55 = por %p53, %p54
    %p56 = scmp.ne.s32.totalorder %s47, %s48
    %p57 = scmp.eq.s32.totalorder %s16, 0
    %p58 = por %p56, %p57
    %p59 = scmp.ne.s32.totalorder %s47, %s48
    %p60 = scmp.eq.s32.totalorder %s17, 1
    %p61 = por %p59, %p60
    %p63 = scmp.ne.s32.totalorder %s48, %s62
    %p64 = scmp.eq.s32.totalorder %s17, 0
    %p65 = por %p63, %p64
    %s67 = sadd.s32 %s66, 1
    %p70 = scmp.eq.s32.totalorder %s11, 1
    %p71 = scmp.ne.s32.totalorder %s66, %s68
    %p72 = scmp.eq.s32.totalorder %s11, 0
    %p73 = por %p71, %p72
    %p74 = scmp.ne.s32.totalorder %s66, %s68
    %p75 = scmp.eq.s32.totalorder %s16, 1
    %p76 = por %p74, %p75
    %p77 = scmp.ne.s32.totalorder %s68, %s69
    %p78 = scmp.eq.s32.totalorder %s16, 0
    %p79 = por %p77, %p78
    %p80 = scmp.ne.s32.totalorder %s68, %s69
    %p81 = scmp.eq.s32.totalorder %s17, 1
    %p82 = por %p80, %p81
    %p84 = scmp.ne.s32.totalorder %s69, %s83
    %p85 = scmp.eq.s32.totalorder %s17, 0
    %p86 = por %p84, %p85
    %s88 = sadd.s32 %s87, 1
    %p91 = scmp.eq.s32.totalorder %s11, 1
    %p92 = scmp.ne.s32.totalorder %s87, %s89
    %p93 = scmp.eq.s32.totalorder %s11, 0
    %p94 = por %p92, %p93
    %p95 = scmp.ne.s32.totalorder %s87, %s89
    %p96 = scmp.eq.s32.totalorder %s16, 1
    %p97 = por %p95, %p96
    %p98 = scmp.ne.s32.totalorder %s89, %s90
    %p99 = scmp.eq.s32.totalorder %s16, 0
    %p100 = por %p98, %p99
    %p101 = scmp.ne.s32.totalorder %s89, %s90
    %p102 = scmp.eq.s32.totalorder %s17, 1
    %p103 = por %p101, %p102
    %p105 = scmp.ne.s32.totalorder %s90, %s104
    %p106 = scmp.eq.s32.totalorder %s17, 0
    %p107 = por %p105, %p106
    %s109 = sadd.s32 %s108, 1
    %p112 = scmp.eq.s32.totalorder %s11, 1
    %p113 = scmp.ne.s32.totalorder %s108, %s110
    %p114 = scmp.eq.s32.totalorder %s11, 0
    %p115 = por %p113, %p114
    %p116 = scmp.ne.s32.totalorder %s108, %s110
    %p117 = scmp.eq.s32.totalorder %s16, 1
    %p118 = por %p116, %p117
    %p119 = scmp.ne.s32.totalorder %s110, %s111
    %p120 = scmp.eq.s32.totalorder %s16, 0
    %p121 = por %p119, %p120
    %p122 = scmp.ne.s32.totalorder %s110, %s111
    %p123 = scmp.eq.s32.totalorder %s17, 1
    %p124 = por %p122, %p123
    %p126 = scmp.ne.s32.totalorder %s111, %s125
    %p127 = scmp.eq.s32.totalorder %s17, 0
    %p128 = por %p126, %p127
    %s129 = ssub.s32 %s11, %s18
    %p130 = scmp.eq.s32.totalorder %s129, 0
    %s132 = sadd.s32 %s131, 1
    %s133 = scalar_select %p130, %s131, %s132
    %p136 = pneg %p130
    %p137 = scmp.eq.s32.totalorder %s11, 1
    %p138 = por %p136, %p137
    %p139 = scmp.ne.s32.totalorder %s131, %s134
    %p140 = scmp.eq.s32.totalorder %s11, 0
    %p141 = por %p139, %p140
    %p142 = scmp.ne.s32.totalorder %s131, %s134
    %p143 = scmp.eq.s32.totalorder %s16, 1
    %p144 = por %p142, %p143
    %p145 = scmp.ne.s32.totalorder %s134, %s135
    %p146 = scmp.eq.s32.totalorder %s16, 0
    %p147 = por %p145, %p146
    %p148 = scmp.ne.s32.totalorder %s134, %s135
    %p149 = scmp.eq.s32.totalorder %s17, 1
    %p150 = por %p148, %p149
    %p152 = scmp.ne.s32.totalorder %s135, %s151
    %p153 = scmp.eq.s32.totalorder %s17, 0
    %p154 = por %p152, %p153
    %p155 = scmp.le.s32.totalorder 1, %s11
    %p156 = scmp.lt.s32.totalorder %s11, 3
    %p157 = pnand %p155, %p156
    %p158 = pneg %p157
    // Predicated region
    $region9: #{visual_encoder_forward.1} parent=5 // pred_check
      _
    $region10: #{visual_encoder_forward.1} parent=5 // pred_check_branch
      %160 = sbr.rel (%p157) target = $region12
    $region11: #{visual_encoder_forward.1} parent=5 // pred_region
      %s161 = ssub.s32 %s11, 1
      // Predicated region
      $region13: #{visual_encoder_forward.1} parent=11 // pred_check
        %p162 = pneg %p58
      $region14: #{visual_encoder_forward.1} parent=11 // pred_check_branch
        %164 = sbr.rel (%p162) target = $region16
      $region15: #{visual_encoder_forward.1} parent=11 // pred_region
        _
      $region16: #{visual_encoder_forward.1} parent=11 // pred_fallthru
        _
      // Predicated region
      $region17: #{visual_encoder_forward.1} parent=11 // pred_check
        %p165 = pneg %p79
      $region18: #{visual_encoder_forward.1} parent=11 // pred_check_branch
        %167 = sbr.rel (%p165) target = $region20
      $region19: #{visual_encoder_forward.1} parent=11 // pred_region
        _
      $region20: #{visual_encoder_forward.1} parent=11 // pred_fallthru
        _
      // Predicated region
      $region21: #{visual_encoder_forward.1} parent=11 // pred_check
        %p168 = pneg %p100
      $region22: #{visual_encoder_forward.1} parent=11 // pred_check_branch
        %170 = sbr.rel (%p168) target = $region24
      $region23: #{visual_encoder_forward.1} parent=11 // pred_region
        _
      $region24: #{visual_encoder_forward.1} parent=11 // pred_fallthru
        _
      // Predicated region
      $region25: #{visual_encoder_forward.1} parent=11 // pred_check
        %p171 = pneg %p121
      $region26: #{visual_encoder_forward.1} parent=11 // pred_check_branch
        %173 = sbr.rel (%p171) target = $region28
      $region27: #{visual_encoder_forward.1} parent=11 // pred_region
        _
      $region28: #{visual_encoder_forward.1} parent=11 // pred_fallthru
        _
    $region12: #{visual_encoder_forward.1} parent=5 // pred_fallthru
      _
    %p174 = scmp.lt.s32.totalorder %s11, 2
    // Predicated region
    $region29: #{visual_encoder_forward.1} parent=5 // pred_check
      %p175 = pneg %p174
    $region30: #{visual_encoder_forward.1} parent=5 // pred_check_branch
      %177 = sbr.rel (%p175) target = $region32
    $region31: #{visual_encoder_forward.1} parent=5 // pred_region
      // Predicated region
      $region33: #{visual_encoder_forward.1} parent=31 // pred_check
        %p178 = pneg %p31
      $region34: #{visual_encoder_forward.1} parent=31 // pred_check_branch
        %180 = sbr.rel (%p178) target = $region36
      $region35: #{visual_encoder_forward.1} parent=31 // pred_region
        %p181 = scmp.lt.s32.totalorder %s11, 1
        %s182 = scalar_select %p181, %s11, 1
        %s183 = smul.addr %s182, 3
        %s184 = smul.addr %s183, 4
        %s185 = scalar_lea.vmem %s0, %s184
      $region36: #{visual_encoder_forward.1} parent=31 // pred_fallthru
        _
    $region32: #{visual_encoder_forward.1} parent=5 // pred_fallthru
      _
    %p186 = scmp.le.s32.totalorder 1, %s11
    %p187 = scmp.lt.s32.totalorder %s11, 3
    %p188 = pnand %p186, %p187
    %p189 = pneg %p188
    // Predicated region
    $region37: #{visual_encoder_forward.1} parent=5 // pred_check
      _
    $region38: #{visual_encoder_forward.1} parent=5 // pred_check_branch
      %191 = sbr.rel (%p188) target = $region40
    $region39: #{visual_encoder_forward.1} parent=5 // pred_region
      %s192 = ssub.s32 %s11, 1
      %p193 = scmp.lt.s32.totalorder %s16, 1
      %s194 = scalar_select %p193, %s16, 1
      %s195 = smul.addr %s194, 3
      %s196 = smul.addr %s195, 4
      %s197 = scalar_lea.vmem %s0, %s196
      %p198 = pneg %p37
      %p199 = pneg %p34
      %p200 = pneg %p58
      %p201 = pneg %p55
      %p202 = pneg %p79
      %p203 = pneg %p76
      %p204 = pneg %p100
      %p205 = pneg %p97
      %p206 = pneg %p121
      %p207 = pneg %p118
      %p208 = pneg %p147
      %p209 = pneg %p144
      %p210 = scmp.lt.s32.totalorder %s16, 1
      %s211 = scalar_select %p210, %s16, 1
      %s212 = scalar_lea.vmem %s5, %s211
      %p213 = scmp.lt.s32.totalorder %s16, 1
      %s214 = scalar_select %p213, %s16, 1
      %s215 = smul.addr %s214, 3
      %s216 = smul.addr %s215, 4
      %s217 = scalar_lea.vmem %s0, %s216
      %p218 = scmp.lt.s32.totalorder %s16, 1
      %s219 = scalar_select %p218, %s16, 1
      %s220 = scalar_lea.vmem %s5, %s219
      %v222 = vld [vmem:[%s217] sm:$0xf]
      %v223 = vld [vmem:[%s217 + $0x4] sm:$0xf]
      %v224 = vld [vmem:[%s217 + $0x8] sm:$0x1]
      %v225 = vld [vmem:[%s1] sm:$0xf]
      %v226 = vld [vmem:[%s1 + $0x4] sm:$0xf]
      %v227 = vld [vmem:[%s1 + $0x8] sm:$0xf]
      %v228 = vld [vmem:[%s1 + $0xc] sm:$0xf]
      %v229 = vld [vmem:[%s1 + $0x10] sm:$0xf]
      %v230 = vld [vmem:[%s1 + $0x14] sm:$0xf]
      %v231 = vld [vmem:[%s1 + $0x18] sm:$0xf]
      %v232 = vld [vmem:[%s1 + $0x1c] sm:$0xf]
      %v233 = vld [vmem:[%s1 + $0x20] sm:$0xf]
      %s234 = scalar_lea.vmem %s1, 36
      %v235 = vld [vmem:[%s234] sm:$0xf]
      %v236 = vld [vmem:[%s234 + $0x4] sm:$0xf]
      %v237 = vld [vmem:[%s234 + $0x8] sm:$0xf]
      %v238 = vld [vmem:[%s234 + $0xc] sm:$0xf]
      %v239 = vld [vmem:[%s234 + $0x10] sm:$0xf]
      %v240 = vld [vmem:[%s234 + $0x14] sm:$0xf]
      %v241 = vld [vmem:[%s234 + $0x18] sm:$0xf]
      %v242 = vld [vmem:[%s234 + $0x1c] sm:$0xf]
      %v243 = vld [vmem:[%s234 + $0x20] sm:$0xf]
      %v247 = vunpack.c.l.b16 %v222
      %v248 = vunpack.c.l.b16 %v223
      %v249 = vunpack.c.l.b16 %v224
      %v250 = vpack.c.b16 %v248, %v247
      %v251 = vpack.c.b16 %v249, %v249
      %vm252 = vsmask.f32 7424
      %v254 = vshrl.u32 %v250, 16
      %v256 = vshll.u32 %v250, 16
      %v258 = vrot.slane %v256, 1
      %v259 = vor.u32 %v254, %v258
      %v261 = vshll.u32 %v251, 16
      %v263 = vrot.slane %v261, 1
      %v264 = vsel %vm252, %v259, %v263
      %v274 = vunpack.c.l.b16 %v235
      %v275 = vunpack.c.l.b16 %v236
      %v276 = vunpack.c.l.b16 %v237
      %v277 = vunpack.c.l.b16 %v238
      %v278 = vunpack.c.l.b16 %v239
      %v279 = vunpack.c.l.b16 %v240
      %v280 = vunpack.c.l.b16 %v241
      %v281 = vunpack.c.l.b16 %v242
      %v282 = vunpack.c.l.b16 %v243
      %v283 = vpack.c.b16 %v275, %v274
      %v284 = vpack.c.b16 %v277, %v276
      %v285 = vpack.c.b16 %v279, %v278
      %v286 = vpack.c.b16 %v281, %v280
      %v287 = vpack.c.b16 %v282, %v282
      %vm292 = vcmask 588800
      %v294 = vsel %vm292, %v264, 0
      %vm296 = vcmask 1043456
      %v298 = vsel %vm296, %v287, 0
      %300 = vmatprep.subr.bf16.mxu0 0
      %301 = vmatpush1.bf16.msra.mxu0 0
      %302 = vmatprep.subr.bf16.mxu0 0
      %303 = vmatpush1.bf16.msra.mxu0 0
      %304 = vmatprep.subr.bf16.mxu0 0
      %305 = vmatpush1.bf16.msra.mxu0 0
      %306 = vmatprep.subr.bf16.mxu0 0
      %307 = vmatpush1.bf16.msra.mxu0 %v298
      %308 = vmatprep.subr.bf16.mxu0 0
      %309 = vmatpush1.bf16.msra.mxu0 %v286
      %310 = vmatprep.subr.bf16.mxu0 0
      %311 = vmatpush1.bf16.msra.mxu0 %v285
      %312 = vmatprep.subr.bf16.mxu0 0
      %313 = vmatpush1.bf16.msra.mxu0 %v284
      %314 = vmatprep.subr.bf16.mxu0 0
      %315 = vmatpush1.bf16.msra.mxu0 %v283
      %316 = vmatprep.subr.bf16.mxu0 0
      %317 = vmatpush2.bf16.msra.mxu0 0
      %318 = vmatprep.subr.bf16.mxu0 0
      %319 = vmatpush2.bf16.msra.mxu0 0
      %320 = vmatprep.subr.bf16.mxu0 0
      %321 = vmatpush2.bf16.msra.mxu0 0
      %322 = vmatprep.subr.bf16.mxu0 0
      %323 = vmatpush2.bf16.msra.mxu0 0
      %324 = vmatprep.subr.bf16.mxu0 0
      %325 = vmatpush2.bf16.msra.mxu0 0
      %326 = vmatprep.subr.bf16.mxu0 0
      %327 = vmatpush2.bf16.msra.mxu0 0
      %328 = vmatprep.subr.bf16.mxu0 0
      %329 = vmatpush2.bf16.msra.mxu0 0
      %330 = vmatprep.subr.bf16.mxu0 0
      %331 = vmatpush2.bf16.msra.mxu0 0
      %332 = vmatprep.mubr.bf16.mxu0 0
      %333 = vmatmul.mubr.bf16.gmra.mxu0 %v294
      %v334 = vpop.f32.mrf.mxu0
      %v335 = vadd.f32 0.0, %v334
      %v336 = vpop.f32.mrf.mxu0
      %v337 = vpop.f32.mrf.mxu0
      %v338 = vadd.f32 0.0, %v337
      %v339 = vpop.f32.mrf.mxu0
      %340 = vdwg.mxu0
      %v350 = vunpack.c.l.b16 %v225
      %v351 = vunpack.c.l.b16 %v226
      %v352 = vunpack.c.l.b16 %v227
      %v353 = vunpack.c.l.b16 %v228
      %v354 = vunpack.c.l.b16 %v229
      %v355 = vunpack.c.l.b16 %v230
      %v356 = vunpack.c.l.b16 %v231
      %v357 = vunpack.c.l.b16 %v232
      %v358 = vunpack.c.l.b16 %v233
      %v359 = vpack.c.b16 %v351, %v350
      %v360 = vpack.c.b16 %v353, %v352
      %v361 = vpack.c.b16 %v355, %v354
      %v362 = vpack.c.b16 %v357, %v356
      %v363 = vpack.c.b16 %v358, %v358
      %v368 = vsel %vm292, %v250, 0
      %v371 = vsel %vm296, %v363, 0
      %373 = vmatprep.subr.bf16.mxu0 0
      %374 = vmatpush1.bf16.msra.mxu0 0
      %375 = vmatprep.subr.bf16.mxu0 0
      %376 = vmatpush1.bf16.msra.mxu0 0
      %377 = vmatprep.subr.bf16.mxu0 0
      %378 = vmatpush1.bf16.msra.mxu0 0
      %379 = vmatprep.subr.bf16.mxu0 0
      %380 = vmatpush1.bf16.msra.mxu0 %v371
      %381 = vmatprep.subr.bf16.mxu0 0
      %382 = vmatpush1.bf16.msra.mxu0 %v362
      %383 = vmatprep.subr.bf16.mxu0 0
      %384 = vmatpush1.bf16.msra.mxu0 %v361
      %385 = vmatprep.subr.bf16.mxu0 0
      %386 = vmatpush1.bf16.msra.mxu0 %v360
      %387 = vmatprep.subr.bf16.mxu0 0
      %388 = vmatpush1.bf16.msra.mxu0 %v359
      %389 = vmatprep.subr.bf16.mxu0 0
      %390 = vmatpush2.bf16.msra.mxu0 0
      %391 = vmatprep.subr.bf16.mxu0 0
      %392 = vmatpush2.bf16.msra.mxu0 0
      %393 = vmatprep.subr.bf16.mxu0 0
      %394 = vmatpush2.bf16.msra.mxu0 0
      %395 = vmatprep.subr.bf16.mxu0 0
      %396 = vmatpush2.bf16.msra.mxu0 0
      %397 = vmatprep.subr.bf16.mxu0 0
      %398 = vmatpush2.bf16.msra.mxu0 0
      %399 = vmatprep.subr.bf16.mxu0 0
      %400 = vmatpush2.bf16.msra.mxu0 0
      %401 = vmatprep.subr.bf16.mxu0 0
      %402 = vmatpush2.bf16.msra.mxu0 0
      %403 = vmatprep.subr.bf16.mxu0 0
      %404 = vmatpush2.bf16.msra.mxu0 0
      %405 = vmatprep.mubr.bf16.mxu0 0
      %406 = vmatmul.mubr.bf16.gmra.mxu0 %v368
      %v407 = vpop.f32.mrf.mxu0
      %v408 = vadd.f32 %v335, %v407
      %v409 = vpop.f32.mrf.mxu0
      %v410 = vpop.f32.mrf.mxu0
      %v411 = vadd.f32 %v338, %v410
      %v412 = vpop.f32.mrf.mxu0
      %413 = vdwg.mxu0
      %s414 = scalar_lea.vmem %s1, 72
      %v415 = vld [vmem:[%s414] sm:$0xf]
      %v416 = vld [vmem:[%s414 + $0x4] sm:$0xf]
      %v417 = vld [vmem:[%s414 + $0x8] sm:$0xf]
      %v418 = vld [vmem:[%s414 + $0xc] sm:$0xf]
      %v419 = vld [vmem:[%s414 + $0x10] sm:$0xf]
      %v420 = vld [vmem:[%s414 + $0x14] sm:$0xf]
      %v421 = vld [vmem:[%s414 + $0x18] sm:$0xf]
      %v422 = vld [vmem:[%s414 + $0x1c] sm:$0xf]
      %v423 = vld [vmem:[%s414 + $0x20] sm:$0xf]
      %vm424 = vcmask 1046528
      %v425 = vrot.slane %v250, 1
      %v426 = vrot.slane %v251, 1
      %v427 = vsel %vm424, %v425, %v426
      %v437 = vunpack.c.l.b16 %v415
      %v438 = vunpack.c.l.b16 %v416
      %v439 = vunpack.c.l.b16 %v417
      %v440 = vunpack.c.l.b16 %v418
      %v441 = vunpack.c.l.b16 %v419
      %v442 = vunpack.c.l.b16 %v420
      %v443 = vunpack.c.l.b16 %v421
      %v444 = vunpack.c.l.b16 %v422
      %v445 = vunpack.c.l.b16 %v423
      %v446 = vpack.c.b16 %v438, %v437
      %v447 = vpack.c.b16 %v440, %v439
      %v448 = vpack.c.b16 %v442, %v441
      %v449 = vpack.c.b16 %v444, %v443
      %v450 = vpack.c.b16 %v445, %v445
      %v456 = vsel %vm292, %v427, 0
      %v459 = vsel %vm296, %v450, 0
      %461 = vmatprep.subr.bf16.mxu0 0
      %462 = vmatpush1.bf16.msra.mxu0 0
      %463 = vmatprep.subr.bf16.mxu0 0
      %464 = vmatpush1.bf16.msra.mxu0 0
      %465 = vmatprep.subr.bf16.mxu0 0
      %466 = vmatpush1.bf16.msra.mxu0 0
      %467 = vmatprep.subr.bf16.mxu0 0
      %468 = vmatpush1.bf16.msra.mxu0 %v459
      %469 = vmatprep.subr.bf16.mxu0 0
      %470 = vmatpush1.bf16.msra.mxu0 %v449
      %471 = vmatprep.subr.bf16.mxu0 0
      %472 = vmatpush1.bf16.msra.mxu0 %v448
      %473 = vmatprep.subr.bf16.mxu0 0
      %474 = vmatpush1.bf16.msra.mxu0 %v447
      %475 = vmatprep.subr.bf16.mxu0 0
      %476 = vmatpush1.bf16.msra.mxu0 %v446
      %477 = vmatprep.subr.bf16.mxu0 0
      %478 = vmatpush2.bf16.msra.mxu0 0
      %479 = vmatprep.subr.bf16.mxu0 0
      %480 = vmatpush2.bf16.msra.mxu0 0
      %481 = vmatprep.subr.bf16.mxu0 0
      %482 = vmatpush2.bf16.msra.mxu0 0
      %483 = vmatprep.subr.bf16.mxu0 0
      %484 = vmatpush2.bf16.msra.mxu0 0
      %485 = vmatprep.subr.bf16.mxu0 0
      %486 = vmatpush2.bf16.msra.mxu0 0
      %487 = vmatprep.subr.bf16.mxu0 0
      %488 = vmatpush2.bf16.msra.mxu0 0
      %489 = vmatprep.subr.bf16.mxu0 0
      %490 = vmatpush2.bf16.msra.mxu0 0
      %491 = vmatprep.subr.bf16.mxu0 0
      %492 = vmatpush2.bf16.msra.mxu0 0
      %493 = vmatprep.mubr.bf16.mxu0 0
      %494 = vmatmul.mubr.bf16.gmra.mxu0 %v456
      %v495 = vpop.f32.mrf.mxu0
      %v496 = vadd.f32 0.0, %v495
      %v497 = vpop.f32.mrf.mxu0
      %v498 = vpop.f32.mrf.mxu0
      %v499 = vadd.f32 0.0, %v498
      %v500 = vpop.f32.mrf.mxu0
      %501 = vdwg.mxu0
      %v502 = vadd.f32 %v408, %v496
      %v503 = vadd.f32 %v411, %v499
      %v504 = vld [vmem:[%s2] sm:$0x1]
      %v506 = vlaneseq
      %v507 = vshrl.u32 %v506, 7
      %v508 = vsub.s32 0, %v507
      %v509 = vrot.slane %v504, %v508
      %v511 = vadd.f32 %v502, %v509
      %v512 = vadd.f32 %v503, %v509
      %v513 = vmax.f32 %v511, 0.0
      %v514 = vmax.f32 %v512, 0.0
      %v515 = vpack.c.bf16 %v514, %v513
      %v516 = vld [vmem:[%s3] sm:$0xf]
      %v517 = vld [vmem:[%s3 + $0x4] sm:$0xf]
      %v518 = vld [vmem:[%s3 + $0x8] sm:$0xf]
      %v519 = vld [vmem:[%s3 + $0xc] sm:$0xf]
      %v520 = vld [vmem:[%s3 + $0x10] sm:$0xf]
      %v521 = vld [vmem:[%s3 + $0x14] sm:$0xf]
      %v522 = vld [vmem:[%s3 + $0x18] sm:$0xf]
      %v523 = vld [vmem:[%s3 + $0x1c] sm:$0xf]
      %v524 = vld [vmem:[%s3 + $0x20] sm:$0xf]
      %v525 = vld [vmem:[%s3 + $0x24] sm:$0xf]
      %v526 = vld [vmem:[%s3 + $0x28] sm:$0xf]
      %v527 = vld [vmem:[%s3 + $0x2c] sm:$0xf]
      %v528 = vld [vmem:[%s3 + $0x30] sm:$0xf]
      %v529 = vld [vmem:[%s3 + $0x34] sm:$0xf]
      %v530 = vld [vmem:[%s3 + $0x38] sm:$0xf]
      %v531 = vld [vmem:[%s3 + $0x3c] sm:$0xf]
      %v548 = vunpack.c.l.b16 %v516
      %v549 = vunpack.c.l.b16 %v517
      %v550 = vunpack.c.l.b16 %v518
      %v551 = vunpack.c.l.b16 %v519
      %v552 = vunpack.c.l.b16 %v520
      %v553 = vunpack.c.l.b16 %v521
      %v554 = vunpack.c.l.b16 %v522
      %v555 = vunpack.c.l.b16 %v523
      %v556 = vunpack.c.l.b16 %v524
      %v557 = vunpack.c.l.b16 %v525
      %v558 = vunpack.c.l.b16 %v526
      %v559 = vunpack.c.l.b16 %v527
      %v560 = vunpack.c.l.b16 %v528
      %v561 = vunpack.c.l.b16 %v529
      %v562 = vunpack.c.l.b16 %v530
      %v563 = vunpack.c.l.b16 %v531
      %v564 = vpack.c.b16 %v549, %v548
      %v565 = vpack.c.b16 %v551, %v550
      %v566 = vpack.c.b16 %v553, %v552
      %v567 = vpack.c.b16 %v555, %v554
      %v568 = vpack.c.b16 %v557, %v556
      %v569 = vpack.c.b16 %v559, %v558
      %v570 = vpack.c.b16 %v561, %v560
      %v571 = vpack.c.b16 %v563, %v562
      %580 = vmatprep.subr.bf16.mxu0 0
      %581 = vmatpush1.bf16.msra.mxu0 %v571
      %582 = vmatprep.subr.bf16.mxu0 0
      %583 = vmatpush1.bf16.msra.mxu0 %v570
      %584 = vmatprep.subr.bf16.mxu0 0
      %585 = vmatpush1.bf16.msra.mxu0 %v569
      %586 = vmatprep.subr.bf16.mxu0 0
      %587 = vmatpush1.bf16.msra.mxu0 %v568
      %588 = vmatprep.subr.bf16.mxu0 0
      %589 = vmatpush1.bf16.msra.mxu0 %v567
      %590 = vmatprep.subr.bf16.mxu0 0
      %591 = vmatpush1.bf16.msra.mxu0 %v566
      %592 = vmatprep.subr.bf16.mxu0 0
      %593 = vmatpush1.bf16.msra.mxu0 %v565
      %594 = vmatprep.subr.bf16.mxu0 0
      %595 = vmatpush1.bf16.msra.mxu0 %v564
      %596 = vmatprep.subr.bf16.mxu0 0
      %597 = vmatpush2.bf16.msra.mxu0 0
      %598 = vmatprep.subr.bf16.mxu0 0
      %599 = vmatpush2.bf16.msra.mxu0 0
      %600 = vmatprep.subr.bf16.mxu0 0
      %601 = vmatpush2.bf16.msra.mxu0 0
      %602 = vmatprep.subr.bf16.mxu0 0
      %603 = vmatpush2.bf16.msra.mxu0 0
      %604 = vmatprep.subr.bf16.mxu0 0
      %605 = vmatpush2.bf16.msra.mxu0 0
      %606 = vmatprep.subr.bf16.mxu0 0
      %607 = vmatpush2.bf16.msra.mxu0 0
      %608 = vmatprep.subr.bf16.mxu0 0
      %609 = vmatpush2.bf16.msra.mxu0 0
      %610 = vmatprep.subr.bf16.mxu0 0
      %611 = vmatpush2.bf16.msra.mxu0 0
      %612 = vmatprep.mubr.bf16.mxu0 0
      %613 = vmatmul.mubr.bf16.gmra.mxu0 %v515
      %v614 = vpop.f32.mrf.mxu0
      %v615 = vadd.f32 0.0, %v614
      %v616 = vpop.f32.mrf.mxu0
      %v617 = vpop.f32.mrf.mxu0
      %v618 = vadd.f32 0.0, %v617
      %v619 = vpop.f32.mrf.mxu0
      %620 = vdwg.mxu0
      %v621 = vadd.f32 %v615, %v618
      %v622 = vrot.slane %v621, 4
      %v623 = vadd.f32 %v621, %v622
      %v624 = vrot.slane %v623, 2
      %v625 = vadd.f32 %v623, %v624
      %v626 = vrot.slane %v625, 1
      %v627 = vadd.f32 %v625, %v626
      %v628 = vmul.f32 %v627, 0.00390625
      %v629 = vld [vmem:[%s4] sm:$0x1]
      %v630 = vadd.f32 %v628, %v629
      %v631 = vlaneseq
      %v632 = vand.u32 %v631, 127
      %vm633 = vcmp.ge.s32.totalorder %v632, 10
      %vm634 = vcmp.lt.s32.totalorder %v632, 42
      %vm635 = vmand %vm633, %vm634
      %v636 = vtanh.pop %v630
      %v637 = vsel %vm635, %v636, %v630
      %638 = vst [vmem:[%s220] sm:$0x1] %v637
      %p639 = scmp.lt.s32.totalorder %s16, 1
      %s640 = scalar_select %p639, %s16, 1
      %s641 = scalar_lea.vmem %s5, %s640
      // Predicated region
      $region41: #{visual_encoder_forward.1} parent=39 // pred_check
        %p642 = pneg %p144
      $region42: #{visual_encoder_forward.1} parent=39 // pred_check_branch
        %644 = sbr.rel (%p642) target = $region44
      $region43: #{visual_encoder_forward.1} parent=39 // pred_region
        _
      $region44: #{visual_encoder_forward.1} parent=39 // pred_fallthru
        _
    $region40: #{visual_encoder_forward.1} parent=5 // pred_fallthru
      _
    %p645 = scmp.le.s32.totalorder 2, %s11
    // Predicated region
    $region45: #{visual_encoder_forward.1} parent=5 // pred_check
      %p646 = pneg %p645
    $region46: #{visual_encoder_forward.1} parent=5 // pred_check_branch
      %648 = sbr.rel (%p646) target = $region48
    $region47: #{visual_encoder_forward.1} parent=5 // pred_region
      %s649 = ssub.s32 %s11, 2
      // Predicated region
      $region49: #{visual_encoder_forward.1} parent=47 // pred_check
        %p650 = pneg %p150
      $region50: #{visual_encoder_forward.1} parent=47 // pred_check_branch
        %652 = sbr.rel (%p650) target = $region52
      $region51: #{visual_encoder_forward.1} parent=47 // pred_region
        %p653 = scmp.lt.s32.totalorder %s17, 1
        %s654 = scalar_select %p653, %s17, 1
        %s655 = scalar_lea.vmem %s5, %s654
      $region52: #{visual_encoder_forward.1} parent=47 // pred_fallthru
        _
    $region48: #{visual_encoder_forward.1} parent=5 // pred_fallthru
      _
  $region6: #{visual_encoder_forward.1} parent=0 // loop_footer
    %s15 = sadd.s32 1, %s11
  $region7: #{visual_encoder_forward.1} parent=0 // loop_footer_branch
    %10 = sbr.rel target = $region3
  $region8: #{visual_encoder_forward.1} parent=0 // loop_exit
    _

</llo_original>
